<compile_context>
chip_gen: v5e
topology: v5e:2x2
jax: 0.10.0
libtpu: 0.0.40
codegen_flags: <defaults>
</compile_context>

<pallas_src>
import jax
import jax.numpy as jnp
from jax.experimental import pallas as pl
from jax.experimental.pallas import tpu as pltpu


def _round_up(x, m):
    return (x + m - 1) // m * m


# ----------------------------- Pallas kernels ------------------------------ #
def gemm_stats_kernel(xg_ref, w_ref, stats_ref):
    """Pass 1 (stats only): one N-tile GEMM on the MXU + per-tile BN partials.

    xg_ref   : (TN, KC_pad)       gathered features, K*Cin flattened (bf16)
    w_ref    : (KC_pad, Cout_pad) resident weights (same block every tile)
    stats_ref: (2, Cout_pad)      f32; row 0 = sum(y), row 1 = sum(y*y)

    The pre-BN activations are NOT written to HBM; they are recomputed in
    pass 2 (cheaper than the write+read round trip in a mem-bound kernel).
    Zero-padded rows/columns contribute exactly zero to both moments.
    """
    y = jnp.dot(xg_ref[...], w_ref[...], preferred_element_type=jnp.float32)
    s1 = jnp.sum(y, axis=0, keepdims=True)          # (1, Cout_pad)
    s2 = jnp.sum(y * y, axis=0, keepdims=True)      # (1, Cout_pad)
    stats_ref[...] = jnp.concatenate([s1, s2], axis=0)


def gemm_bn_relu_kernel(xg_ref, w_ref, scale_ref, shift_ref, o_ref):
    """Pass 2: recompute the GEMM, fuse BatchNorm affine (precomputed
    per-channel scale/shift) + ReLU, store only the true Cout columns."""
    y = jnp.dot(xg_ref[...], w_ref[...], preferred_element_type=jnp.float32)
    z = jnp.maximum(y * scale_ref[...] + shift_ref[...], 0.0)   # lane-dense FMA
    o_ref[...] = z[:, :o_ref.shape[-1]].astype(o_ref.dtype)


# ------------------------------ JAX glue ----------------------------------- #
def build_gathered_features(feats, coords, grid_size, ks, *, n_pad, kc_pad,
                            dtype=jnp.bfloat16):
    """Kernel map + gather for stride=1 transposed sparse conv.

    Output coords == input coords; out[c] accumulates W[k] applied to the
    input point at c - offset[k] (missing neighbors contribute zero).
    Returns a (n_pad, kc_pad) `dtype` array whose leading (N, K*Cin) block is
    the gathered features in the (k, c) flattened order matching
    weight.reshape(K*Cin, Cout); the padding is zero (exact in the GEMM).
    """
    r = ks // 2
    ax = jnp.arange(-r, r + 1)
    offs = jnp.stack(jnp.meshgrid(ax, ax, ax, indexing="ij"),
                     axis=-1).reshape(-1, 3)                       # (K, 3)
    N, Cin = feats.shape
    K = offs.shape[0]
    vox = -jnp.ones((grid_size,) * 3, dtype=jnp.int32)
    vox = vox.at[coords[:, 0], coords[:, 1], coords[:, 2]].set(
        jnp.arange(N, dtype=jnp.int32))
    nbr = coords[:, None, :] - offs[None, :, :]                    # (N, K, 3)
    in_bounds = jnp.all((nbr >= 0) & (nbr < grid_size), axis=-1)   # (N, K)
    nbr_c = jnp.clip(nbr, 0, grid_size - 1)
    idx = vox[nbr_c[..., 0], nbr_c[..., 1], nbr_c[..., 2]]         # (N, K)
    valid = in_bounds & (idx >= 0)
    gathered = feats[jnp.clip(idx, 0, N - 1)].astype(dtype)        # (N, K, Cin)
    gathered = jnp.where(valid[..., None], gathered,
                         jnp.zeros((), dtype)).reshape(N, K * Cin)
    out = jnp.zeros((n_pad, kc_pad), dtype)
    return out.at[:N, :K * Cin].set(gathered)


# ------------------------------- wrapper ----------------------------------- #
def basic_deconvolution_block(feats, coords, grid_size, weight, gamma, beta, *,
                              ks=3, n_tile=1024, compute_dtype=jnp.bfloat16,
                              eps=1e-5):
    """feats: (N, Cin) point features, coords: (N, 3) int32 voxel coords,
    weight: (K, Cin, Cout), gamma/beta: (Cout,).  Returns (N, Cout)."""
    N, Cin = feats.shape
    K, Cin_w, Cout = weight.shape
    assert Cin_w == Cin and K == ks ** 3
    LANE = 128

    KC = K * Cin
    KC_pad = _round_up(KC, LANE)          # 108 -> 128: MXU-native contraction
    Cout_pad = _round_up(Cout, LANE)      # lane-dense scale/shift math only

    # N tiling: large tiles (mem-bound sweet spot), but keep >= 2 tiles when
    # possible so v7x's second TensorCore gets work via the parallel axis.
    TN = min(_round_up(n_tile, 8), _round_up(N, 8))
    if N > 8 and _round_up(N, TN) // TN < 2:
        TN = _round_up((N + 1) // 2, 8)
    N_pad = _round_up(N, TN)
    nN = N_pad // TN

    # Gather already emitted as the padded bf16 MXU operand (no extra pad pass).
    xg = build_gathered_features(feats, coords, grid_size, ks,
                                 n_pad=N_pad, kc_pad=KC_pad,
                                 dtype=compute_dtype)

    w2 = jnp.zeros((KC_pad, Cout_pad), compute_dtype)
    w2 = w2.at[:KC, :Cout].set(weight.reshape(KC, Cout).astype(compute_dtype))

    # ---- pass 1: stats-only GEMM (no pre-BN activations hit HBM) --------- #
    stats = pl.pallas_call(
        gemm_stats_kernel,
        out_shape=jax.ShapeDtypeStruct((nN, 2, Cout_pad), jnp.float32),
        grid_spec=pltpu.PrefetchScalarGridSpec(
            num_scalar_prefetch=0,
            grid=(nN,),
            in_specs=[
                pl.BlockSpec((TN, KC_pad), lambda i: (i, 0)),
                pl.BlockSpec((KC_pad, Cout_pad), lambda i: (0, 0)),  # resident
            ],
            out_specs=pl.BlockSpec((None, 2, Cout_pad), lambda i: (i, 0, 0)),
        ),
        compiler_params=pltpu.CompilerParams(
            dimension_semantics=("parallel",)),
    )(xg, w2)

    # ---- tiny global BN finalize (2 x Cout numbers) in plain JAX --------- #
    s1 = jnp.sum(stats[:, 0, :], axis=0)                     # (Cout_pad,)
    s2 = jnp.sum(stats[:, 1, :], axis=0)                     # (Cout_pad,)
    mean = s1 / N                                            # biased stats over N
    var = jnp.maximum(s2 / N - mean * mean, 0.0)
    rstd = jax.lax.rsqrt(var + eps)
    gamma_p = jnp.zeros((Cout_pad,), jnp.float32).at[:Cout].set(
        gamma.reshape(-1).astype(jnp.float32))
    beta_p = jnp.zeros((Cout_pad,), jnp.float32).at[:Cout].set(
        beta.reshape(-1).astype(jnp.float32))
    scale = (gamma_p * rstd)[None, :]                        # (1, Cout_pad)
    shift = (beta_p - mean * gamma_p * rstd)[None, :]        # (1, Cout_pad)

    # ---- pass 2: recompute GEMM + fused BN affine + ReLU, narrow output -- #
    out = pl.pallas_call(
        gemm_bn_relu_kernel,
        out_shape=jax.ShapeDtypeStruct((N_pad, Cout), feats.dtype),
        grid_spec=pltpu.PrefetchScalarGridSpec(
            num_scalar_prefetch=0,
            grid=(nN,),
            in_specs=[
                pl.BlockSpec((TN, KC_pad), lambda i: (i, 0)),
                pl.BlockSpec((KC_pad, Cout_pad), lambda i: (0, 0)),  # resident
                pl.BlockSpec((1, Cout_pad), lambda i: (0, 0)),
                pl.BlockSpec((1, Cout_pad), lambda i: (0, 0)),
            ],
            out_specs=pl.BlockSpec((TN, Cout), lambda i: (i, 0)),
        ),
        compiler_params=pltpu.CompilerParams(
            dimension_semantics=("parallel",)),
    )(xg, w2, scale, shift)

    return out[:N]


# ------------------------------- main -------------------------------------- #
if __name__ == "__main__":
    # Small shapes: N=64 active voxels in an 8^3 grid, inc=4, outc=8, ks=3.
    N, Cin, Cout, ks, G = 64, 4, 8, 3, 8
    K = ks ** 3

    key = jax.random.PRNGKey(0)
    k_coord, k_feat, k_w = jax.random.split(key, 3)

    # Unique voxel coordinates (sparse tensor coordinates).
    flat = jax.random.permutation(k_coord, G * G * G)[:N]
    coords = jnp.stack([flat // (G * G), (flat // G) % G, flat % G],
                       axis=-1).astype(jnp.int32)                  # (N, 3)
    feats = jax.random.normal(k_feat, (N, Cin), dtype=jnp.float32)  # (N, Cin)

    # spnn.Conv3d(inc, outc, ks=3, transposed=True) weight: (K, inc, outc),
    # bias=False (torchsparse default). Deterministic synthetic init.
    weight = 0.1 * jax.random.normal(k_w, (K, Cin, Cout), dtype=jnp.float32)
    gamma = jnp.ones((Cout,), jnp.float32)   # BN weight init
    beta = jnp.zeros((Cout,), jnp.float32)   # BN bias init

    out = basic_deconvolution_block(feats, coords, G, weight, gamma, beta, ks=ks)
    out = jax.block_until_ready(out)

    # Pure-JAX reference (same bf16 MXU operand precision, f32 accumulation &
    # f32 training-mode BatchNorm with biased variance, eps=1e-5, then ReLU).
    xg_ref = build_gathered_features(feats, coords, G, ks,
                                     n_pad=N, kc_pad=K * Cin,
                                     dtype=jnp.bfloat16)            # (N, K*Cin)
    y = jnp.dot(xg_ref, weight.reshape(K * Cin, Cout).astype(jnp.bfloat16),
                preferred_element_type=jnp.float32)
    mean = y.mean(0, keepdims=True)
    var = ((y - mean) ** 2).mean(0, keepdims=True)
    ref = jnp.maximum((y - mean) * jax.lax.rsqrt(var + 1e-5) * gamma[None]
                      + beta[None], 0.0)

    assert out.shape == (N, Cout)
    assert jnp.allclose(out, ref, atol=2e-3, rtol=2e-3), \
        float(jnp.max(jnp.abs(out - ref)))

    print("KERNEL_OK")
</pallas_src>

<mosaic_0001>
module attributes {stable_mosaic.version = 11 : i64} {
  func.func @gemm_stats_kernel(%arg0: i32, %arg1: memref<32x128xbf16, #tpu.memory_space<vmem>>, %arg2: memref<128x128xbf16, #tpu.memory_space<vmem>>, %arg3: memref<1x2x128xf32, #tpu.memory_space<vmem>>) attributes {dimension_semantics = [#tpu.dimension_semantics<parallel>], iteration_bounds = array<i64: 2>, scalar_prefetch = 0 : i64, scratch_operands = 0 : i64, tpu.core_type = #tpu.core_type<tc>, window_params = [{transform_indices = @transform_0, window_bounds = array<i64: 32, 128>}, {pipeline_mode = #tpu.pipeline_mode<synchronous>, transform_indices = @transform_1, window_bounds = array<i64: 128, 128>}, {transform_indices = @transform_2, window_bounds = array<i64: 1, 2, 128>}]} {
    %c0 = arith.constant 0 : index
    %c0_0 = arith.constant 0 : index
    %0 = vector.load %arg1[%c0, %c0_0] : memref<32x128xbf16, #tpu.memory_space<vmem>>, vector<32x128xbf16>
    %c0_1 = arith.constant 0 : index
    %c0_2 = arith.constant 0 : index
    %1 = vector.load %arg2[%c0_1, %c0_2] : memref<128x128xbf16, #tpu.memory_space<vmem>>, vector<128x128xbf16>
    %cst = arith.constant dense<0.000000e+00> : vector<32x128xf32>
    %2 = tpu.matmul %0, %1, %cst {dimension_numbers = #tpu.dot_dimension_numbers<[1], [0], [0], [1], [0, 0, 1, 1], [], []>} : vector<32x128xbf16>, vector<128x128xbf16>, vector<32x128xf32> -> vector<32x128xf32>
    %cst_3 = arith.constant dense<0.000000e+00> : vector<128xf32>
    %3 = vector.multi_reduction <add>, %2, %cst_3 [0] : vector<32x128xf32> to vector<128xf32>
    %4 = vector.shape_cast %3 : vector<128xf32> to vector<1x128xf32>
    %5 = arith.mulf %2, %2 : vector<32x128xf32>
    %cst_4 = arith.constant dense<0.000000e+00> : vector<128xf32>
    %6 = vector.multi_reduction <add>, %5, %cst_4 [0] : vector<32x128xf32> to vector<128xf32>
    %7 = vector.shape_cast %6 : vector<128xf32> to vector<1x128xf32>
    %8 = tpu.concatenate %4, %7 in 0 : vector<1x128xf32>, vector<1x128xf32> -> vector<2x128xf32>
    %c0_5 = arith.constant 0 : index
    %c0_6 = arith.constant 0 : index
    %c0_7 = arith.constant 0 : index
    %9 = vector.load %arg3[%c0_5, %c0_6, %c0_7] : memref<1x2x128xf32, #tpu.memory_space<vmem>>, vector<1x2x128xf32>
    %10 = vector.shape_cast %9 : vector<1x2x128xf32> to vector<2x128xf32>
    %11 = vector.shape_cast %8 : vector<2x128xf32> to vector<1x2x128xf32>
    tpu.vector_store %arg3[%c0_5, %c0_6, %c0_7], %11 {strides = array<i32>} : memref<1x2x128xf32, #tpu.memory_space<vmem>>, vector<1x2x128xf32>,
    return
  }
  func.func @transform_0(%arg0: i32) -> (i32, i32) {
    %c0_i32 = arith.constant 0 : i32
    %c0_i32_0 = arith.constant 0 : i32
    return %arg0, %c0_i32 : i32, i32
  }
  func.func @transform_1(%arg0: i32) -> (i32, i32) {
    %c0_i32 = arith.constant 0 : i32
    %c0_i32_0 = arith.constant 0 : i32
    %c0_i32_1 = arith.constant 0 : i32
    return %c0_i32, %c0_i32_0 : i32, i32
  }
  func.func @transform_2(%arg0: i32) -> (i32, i32, i32) {
    %c0_i32 = arith.constant 0 : i32
    %c0_i32_0 = arith.constant 0 : i32
    %c0_i32_1 = arith.constant 0 : i32
    return %arg0, %c0_i32, %c0_i32_0 : i32, i32, i32
  }
}

</mosaic_0001>

<llo_original>
// kernel: tpu_custom_call.1
$region0: #{tpu_custom_call.1}
  #allocation0 [shape = 'u32[]', space=smem, size = 0x4, offset = 0x4, fixed_abs, tag = 'smem constant byte address 0x4 - core index']
  #allocation1 [shape = 'u32[72,128]{1,0:T(1,128)}', space=vmem, size = 0x9000, scoped, tag = 'internal scratch']
  %s0 = inlined_call_operand.hbm [shape: bf16[64,128], index: 0, kind: input, shape index: {}]
  %s1 = inlined_call_operand.hbm [shape: bf16[128,128], index: 1, kind: input, shape index: {}]
  %s2 = inlined_call_operand.hbm [shape: f32[2,2,128], index: 2, kind: output, shape index: {}]
  %s3 = sld [smem:[#allocation0]]
  $region49: #{tpu_custom_call.1} parent=0
    _
  %s5 = ssub.s32 1, %s3
  %s6 = scalar_select 0, %s5, %s3
  $region1: #{tpu_custom_call.1} parent=0
    #allocation2 [shape = 'u8[16384]{0}', space=vmem, size = 0x4000, scoped, tag = 'input window, operand 0']
    #allocation3 [shape = 's32[2]{0}', space=sflag, size = 0x8, scoped, tag = 'scoped memory for tpu_custom_call.1']
    #allocation4 [shape = 's32[2]{0}', space=sflag, size = 0x8, scoped, tag = 'scoped memory for tpu_custom_call.1']
    #allocation5 [shape = 'u8[32768]{0}', space=vmem, size = 0x8000, scoped, tag = 'input window, operand 1, single buffered']
    #allocation6 [shape = 's32[1]{0}', space=sflag, size = 0x4, scoped, tag = 'scoped memory for tpu_custom_call.1']
    #allocation7 [shape = 'u8[2048]{0}', space=vmem, size = 0x800, scoped, tag = 'output window, operand 0']
    %7 = vsyncpa [#allocation3], 0
    %s8 = scalar_lea.sflag [#allocation3], 1
    %9 = vsyncpa %s8, 0
    %10 = vsyncpa [#allocation6], 0
    %11 = vsyncpa [#allocation4], 0
    %s12 = scalar_lea.sflag [#allocation4], 1
    %13 = vsyncpa %s12, 0
    loop: start=0, step=1, limit=4
    $region2: #{tpu_custom_call.1} parent=1 // loop_pre_header
      _
    $region3: #{tpu_custom_call.1} parent=1 // loop_header
      %s15 = sphi 0, %s19
      %p16 = scmp.ge.s32.totalorder %s15, 4
      %s25 = sphi 0, %s27
      %s28 = sphi 0, %s25
      %s29 = sphi 0, %s28
      %s45 = sphi 0, %s29
      %s49 = sphi 0, %s49
      %s51 = sphi 0, %s49
      %s52 = sphi 0, %s51
      %s66 = sphi 0, %s52
      %s72 = sphi 0, %s74
      %s75 = sphi 0, %s72
      %s76 = sphi 0, %s75
      %s92 = sphi 0, %s76
    $region4: #{tpu_custom_call.1} parent=1 // loop_header_branch
      %18 = sbr.rel (%p16) target = $region8
    $region5: #{tpu_custom_call.1} parent=1 // loop_body
      %s20 = ssub.s32 %s15, 1
      %s21 = ssub.s32 %s15, 2
      %s22 = sadd.s32 %s15, 1
      %s23 = ssub.s32 %s15, %s22
      %p24 = scmp.eq.s32.totalorder %s23, 0
      %s26 = sadd.s32 %s25, 1
      %s27 = scalar_select %p24, %s25, %s26
      %p30 = pneg %p24
      %p31 = scmp.eq.s32.totalorder %s15, 1
      %p32 = por %p30, %p31
      %p33 = scmp.ne.s32.totalorder %s25, %s28
      %p34 = scmp.eq.s32.totalorder %s15, 0
      %p35 = por %p33, %p34
      %p36 = scmp.ne.s32.totalorder %s25, %s28
      %p37 = scmp.eq.s32.totalorder %s20, 1
      %p38 = por %p36, %p37
      %p39 = scmp.ne.s32.totalorder %s28, %s29
      %p40 = scmp.eq.s32.totalorder %s20, 0
      %p41 = por %p39, %p40
      %p42 = scmp.ne.s32.totalorder %s28, %s29
      %p43 = scmp.eq.s32.totalorder %s21, 1
      %p44 = por %p42, %p43
      %p46 = scmp.ne.s32.totalorder %s29, %s45
      %p47 = scmp.eq.s32.totalorder %s21, 0
      %p48 = por %p46, %p47
      %s50 = sadd.s32 %s49, 1
      %p53 = scmp.eq.s32.totalorder %s15, 1
      %p54 = scmp.ne.s32.totalorder %s49, %s51
      %p55 = scmp.eq.s32.totalorder %s15, 0
      %p56 = por %p54, %p55
      %p57 = scmp.ne.s32.totalorder %s49, %s51
      %p58 = scmp.eq.s32.totalorder %s20, 1
      %p59 = por %p57, %p58
      %p60 = scmp.ne.s32.totalorder %s51, %s52
      %p61 = scmp.eq.s32.totalorder %s20, 0
      %p62 = por %p60, %p61
      %p63 = scmp.ne.s32.totalorder %s51, %s52
      %p64 = scmp.eq.s32.totalorder %s21, 1
      %p65 = por %p63, %p64
      %p67 = scmp.ne.s32.totalorder %s52, %s66
      %p68 = scmp.eq.s32.totalorder %s21, 0
      %p69 = por %p67, %p68
      %s70 = ssub.s32 %s15, %s22
      %p71 = scmp.eq.s32.totalorder %s70, 0
      %s73 = sadd.s32 %s72, 1
      %s74 = scalar_select %p71, %s72, %s73
      %p77 = pneg %p71
      %p78 = scmp.eq.s32.totalorder %s15, 1
      %p79 = por %p77, %p78
      %p80 = scmp.ne.s32.totalorder %s72, %s75
      %p81 = scmp.eq.s32.totalorder %s15, 0
      %p82 = por %p80, %p81
      %p83 = scmp.ne.s32.totalorder %s72, %s75
      %p84 = scmp.eq.s32.totalorder %s20, 1
      %p85 = por %p83, %p84
      %p86 = scmp.ne.s32.totalorder %s75, %s76
      %p87 = scmp.eq.s32.totalorder %s20, 0
      %p88 = por %p86, %p87
      %p89 = scmp.ne.s32.totalorder %s75, %s76
      %p90 = scmp.eq.s32.totalorder %s21, 1
      %p91 = por %p89, %p90
      %p93 = scmp.ne.s32.totalorder %s76, %s92
      %p94 = scmp.eq.s32.totalorder %s21, 0
      %p95 = por %p93, %p94
      %p96 = scmp.le.s32.totalorder 1, %s15
      %p97 = scmp.lt.s32.totalorder %s15, 3
      %p98 = pnand %p96, %p97
      %p99 = pneg %p98
      // Predicated region
      $region9: #{tpu_custom_call.1} parent=5 // pred_check
        _
      $region10: #{tpu_custom_call.1} parent=5 // pred_check_branch
        %101 = sbr.rel (%p98) target = $region12
      $region11: #{tpu_custom_call.1} parent=5 // pred_region
        %s102 = ssub.s32 %s15, 1
        // Predicated region
        $region13: #{tpu_custom_call.1} parent=11 // pred_check
          %p103 = pneg %p62
        $region14: #{tpu_custom_call.1} parent=11 // pred_check_branch
          %105 = sbr.rel (%p103) target = $region16
        $region15: #{tpu_custom_call.1} parent=11 // pred_region
          %107 = vsyncadd [#allocation6], 0
          %s108 = sshll.u32 %s1, 4
          %s109 = int_to_ptr.hbm [resolvable:$true] %s108
          %s110 = sshll.u32 [#allocation5], 4
          %s111 = int_to_ptr.vmem [resolvable:$true] %s110
          %116 = dma.hbm_to_vmem [thread:$0]  %s109, 1024, %s111, [#allocation6], 64, 64, 4
        $region16: #{tpu_custom_call.1} parent=11 // pred_fallthru
          _
      $region12: #{tpu_custom_call.1} parent=5 // pred_fallthru
        _
      %p117 = scmp.lt.s32.totalorder %s15, 2
      // Predicated region
      $region17: #{tpu_custom_call.1} parent=5 // pred_check
        %p118 = pneg %p117
      $region18: #{tpu_custom_call.1} parent=5 // pred_check_branch
        %120 = sbr.rel (%p118) target = $region20
      $region19: #{tpu_custom_call.1} parent=5 // pred_region
        // Predicated region
        $region21: #{tpu_custom_call.1} parent=19 // pred_check
          %p121 = pneg %p35
        $region22: #{tpu_custom_call.1} parent=19 // pred_check_branch
          %123 = sbr.rel (%p121) target = $region24
        $region23: #{tpu_custom_call.1} parent=19 // pred_region
          %s124 = sand.u32 %s25, 1
          %s125 = scalar_lea.sflag [#allocation3], %s124
          %s126 = sand.u32 %s25, 1
          %s127 = smul.addr %s126, 16
          %s128 = scalar_lea.vmem [#allocation2], %s127
          %s129 = smul.u32 4, %s15
          %131 = vsyncadd %s125, 0
          %s132 = smul.addr %s129, 4
          %s133 = scalar_lea.hbm %s0, %s132
          %s134 = sshll.u32 %s133, 4
          %s135 = int_to_ptr.hbm [resolvable:$true] %s134
          %s136 = sshll.u32 %s128, 4
          %s137 = int_to_ptr.vmem [resolvable:$true] %s136
          %142 = dma.hbm_to_vmem [thread:$0]  %s135, 256, %s137, %s125, 64, 64, 4
        $region24: #{tpu_custom_call.1} parent=19 // pred_fallthru
          _
      $region20: #{tpu_custom_call.1} parent=5 // pred_fallthru
        _
      %p143 = scmp.le.s32.totalorder 1, %s15
      %p144 = scmp.lt.s32.totalorder %s15, 3
      %p145 = pnand %p143, %p144
      %p146 = pneg %p145
      // Predicated region
      $region25: #{tpu_custom_call.1} parent=5 // pred_check
        _
      $region26: #{tpu_custom_call.1} parent=5 // pred_check_branch
        %148 = sbr.rel (%p145) target = $region28
      $region27: #{tpu_custom_call.1} parent=5 // pred_region
        %s149 = ssub.s32 %s15, 1
        %s150 = sand.u32 %s28, 1
        %s151 = scalar_lea.sflag [#allocation3], %s150
        %s152 = sand.u32 %s28, 1
        %s153 = smul.addr %s152, 16
        %s154 = scalar_lea.vmem [#allocation2], %s153
        // Predicated region
        $region29: #{tpu_custom_call.1} parent=27 // pred_check
          %p155 = pneg %p41
        $region30: #{tpu_custom_call.1} parent=27 // pred_check_branch
          %157 = sbr.rel (%p155) target = $region32
        $region31: #{tpu_custom_call.1} parent=27 // pred_region
          %159 = dma.done %s151, 256
        $region32: #{tpu_custom_call.1} parent=27 // pred_fallthru
          _
        // Predicated region
        $region33: #{tpu_custom_call.1} parent=27 // pred_check
          %p160 = pneg %p62
        $region34: #{tpu_custom_call.1} parent=27 // pred_check_branch
          %162 = sbr.rel (%p160) target = $region36
        $region35: #{tpu_custom_call.1} parent=27 // pred_region
          %164 = dma.done [#allocation6], 1024
        $region36: #{tpu_custom_call.1} parent=27 // pred_fallthru
          _
        %s165 = sand.u32 %s28, 1
        %s166 = scalar_lea.sflag [#allocation3], %s165
        %s167 = sand.u32 %s28, 1
        %s168 = smul.addr %s167, 16
        %s169 = scalar_lea.vmem [#allocation2], %s168
        %p170 = pneg %p41
        %p171 = pneg %p38
        %p172 = pneg %p62
        %p173 = pneg %p59
        %p174 = pneg %p88
        %p175 = pneg %p85
        %s176 = sand.u32 %s75, 1
        %s177 = scalar_lea.sflag [#allocation4], %s176
        %s178 = sand.u32 %s75, 1
        %s179 = smul.addr %s178, 2
        %s180 = scalar_lea.vmem [#allocation7], %s179
        %s181 = smul.u32 4, %s20
        %v182 = vld [vmem:[%s154] sm:$0xf]
        %v183 = vld [vmem:[%s154 + $0x4] sm:$0xf]
        %v184 = vld [vmem:[%s154 + $0x8] sm:$0xf]
        %v185 = vld [vmem:[%s154 + $0xc] sm:$0xf]
        %v186 = vld [vmem:[#allocation5] sm:$0xf]
        %v187 = vld [vmem:[#allocation5 + $0x4] sm:$0xf]
        %v188 = vld [vmem:[#allocation5 + $0x8] sm:$0xf]
        %v189 = vld [vmem:[#allocation5 + $0xc] sm:$0xf]
        %v190 = vld [vmem:[#allocation5 + $0x10] sm:$0xf]
        %v191 = vld [vmem:[#allocation5 + $0x14] sm:$0xf]
        %v192 = vld [vmem:[#allocation5 + $0x18] sm:$0xf]
        %v193 = vld [vmem:[#allocation5 + $0x1c] sm:$0xf]
        %v194 = vld [vmem:[#allocation5 + $0x20] sm:$0xf]
        %v195 = vld [vmem:[#allocation5 + $0x24] sm:$0xf]
        %v196 = vld [vmem:[#allocation5 + $0x28] sm:$0xf]
        %v197 = vld [vmem:[#allocation5 + $0x2c] sm:$0xf]
        %v198 = vld [vmem:[#allocation5 + $0x30] sm:$0xf]
        %v199 = vld [vmem:[#allocation5 + $0x34] sm:$0xf]
        %v200 = vld [vmem:[#allocation5 + $0x38] sm:$0xf]
        %v201 = vld [vmem:[#allocation5 + $0x3c] sm:$0xf]
        %v206 = vunpack.c.l.b16 %v182
        %v207 = vunpack.c.l.b16 %v183
        %v208 = vunpack.c.l.b16 %v184
        %v209 = vunpack.c.l.b16 %v185
        %v210 = vpack.c.b16 %v207, %v206
        %v211 = vpack.c.b16 %v209, %v208
        %v230 = vunpack.c.l.b16 %v186
        %v231 = vunpack.c.l.b16 %v187
        %v232 = vunpack.c.l.b16 %v188
        %v233 = vunpack.c.l.b16 %v189
        %v234 = vunpack.c.l.b16 %v190
        %v235 = vunpack.c.l.b16 %v191
        %v236 = vunpack.c.l.b16 %v192
        %v237 = vunpack.c.l.b16 %v193
        %v238 = vunpack.c.l.b16 %v194
        %v239 = vunpack.c.l.b16 %v195
        %v240 = vunpack.c.l.b16 %v196
        %v241 = vunpack.c.l.b16 %v197
        %v242 = vunpack.c.l.b16 %v198
        %v243 = vunpack.c.l.b16 %v199
        %v244 = vunpack.c.l.b16 %v200
        %v245 = vunpack.c.l.b16 %v201
        %v246 = vpack.c.b16 %v231, %v230
        %v247 = vpack.c.b16 %v233, %v232
        %v248 = vpack.c.b16 %v235, %v234
        %v249 = vpack.c.b16 %v237, %v236
        %v250 = vpack.c.b16 %v239, %v238
        %v251 = vpack.c.b16 %v241, %v240
        %v252 = vpack.c.b16 %v243, %v242
        %v253 = vpack.c.b16 %v245, %v244
        %262 = vmatpush.bf16.msra.mxu0 %v253
        %263 = vmatpush.bf16.msra.mxu0 %v252
        %264 = vmatpush.bf16.msra.mxu0 %v251
        %265 = vmatpush.bf16.msra.mxu0 %v250
        %266 = vmatpush.bf16.msra.mxu0 %v249
        %267 = vmatpush.bf16.msra.mxu0 %v248
        %268 = vmatpush.bf16.msra.mxu0 %v247
        %269 = vmatpush.bf16.msra.mxu0 %v246
        %270 = vmatmul.bf16.gmra.mxu0 %v210
        %v271 = vpop.f32.mrf.mxu0
        %v272 = vadd.f32 0.0, %v271
        %v273 = vpop.f32.mrf.mxu0
        %v274 = vadd.f32 0.0, %v273
        %275 = vmatmul.bf16.gmra.mxu0 %v211
        %v276 = vpop.f32.mrf.mxu0
        %v277 = vadd.f32 0.0, %v276
        %v278 = vpop.f32.mrf.mxu0
        %v279 = vadd.f32 0.0, %v278
        %280 = vdwg.mxu0
        %v281 = vadd.f32 %v272, %v274
        %v282 = vadd.f32 %v281, %v277
        %v283 = vadd.f32 %v282, %v279
        %v284 = vrot.slane %v283, 4
        %v285 = vadd.f32 %v283, %v284
        %v286 = vrot.slane %v285, 2
        %v287 = vadd.f32 %v285, %v286
        %v288 = vrot.slane %v287, 1
        %v289 = vadd.f32 %v287, %v288
        %v290 = vmul.f32 %v272, %v272
        %v291 = vmul.f32 %v274, %v274
        %v292 = vmul.f32 %v277, %v277
        %v293 = vmul.f32 %v279, %v279
        %v294 = vadd.f32 %v290, %v291
        %v295 = vadd.f32 %v294, %v292
        %v296 = vadd.f32 %v295, %v293
        %v297 = vrot.slane %v296, 4
        %v298 = vadd.f32 %v296, %v297
        %v299 = vrot.slane %v298, 2
        %v300 = vadd.f32 %v298, %v299
        %v301 = vrot.slane %v300, 1
        %v302 = vadd.f32 %v300, %v301
        %vm303 = vcmask 1040384
        %v304 = vsel %vm303, %v289, %v302
        %305 = vst [vmem:[%s180] sm:$0x3] %v304
        %s306 = sand.u32 %s75, 1
        %s307 = scalar_lea.sflag [#allocation4], %s306
        %s308 = sand.u32 %s75, 1
        %s309 = smul.addr %s308, 2
        %s310 = scalar_lea.vmem [#allocation7], %s309
        // Predicated region
        $region37: #{tpu_custom_call.1} parent=27 // pred_check
          %p311 = pneg %p85
        $region38: #{tpu_custom_call.1} parent=27 // pred_check_branch
          %313 = sbr.rel (%p311) target = $region40
        $region39: #{tpu_custom_call.1} parent=27 // pred_region
          %315 = vsyncadd %s307, 0
          %s316 = smul.addr %s20, 2
          %s317 = scalar_lea.hbm %s2, %s316
          %s319 = sshll.u32 %s310, 4
          %s320 = int_to_ptr.vmem [resolvable:$true] %s319
          %s321 = sshll.u32 %s317, 4
          %s322 = int_to_ptr.hbm [resolvable:$true] %s321
          %324 = dma.vmem_to_hbm [thread:$0]  %s320, 32, %s322, %s307
        $region40: #{tpu_custom_call.1} parent=27 // pred_fallthru
          _
      $region28: #{tpu_custom_call.1} parent=5 // pred_fallthru
        _
      %p325 = scmp.le.s32.totalorder 2, %s15
      // Predicated region
      $region41: #{tpu_custom_call.1} parent=5 // pred_check
        %p326 = pneg %p325
      $region42: #{tpu_custom_call.1} parent=5 // pred_check_branch
        %328 = sbr.rel (%p326) target = $region44
      $region43: #{tpu_custom_call.1} parent=5 // pred_region
        %s329 = ssub.s32 %s15, 2
        // Predicated region
        $region45: #{tpu_custom_call.1} parent=43 // pred_check
          %p330 = pneg %p91
        $region46: #{tpu_custom_call.1} parent=43 // pred_check_branch
          %332 = sbr.rel (%p330) target = $region48
        $region47: #{tpu_custom_call.1} parent=43 // pred_region
          %s333 = sand.u32 %s76, 1
          %s334 = scalar_lea.sflag [#allocation4], %s333
          %s335 = sand.u32 %s76, 1
          %s336 = smul.addr %s335, 2
          %s337 = scalar_lea.vmem [#allocation7], %s336
          %339 = dma.done %s334, 32
        $region48: #{tpu_custom_call.1} parent=43 // pred_fallthru
          _
      $region44: #{tpu_custom_call.1} parent=5 // pred_fallthru
        _
    $region6: #{tpu_custom_call.1} parent=1 // loop_footer
      %s19 = sadd.s32 1, %s15
    $region7: #{tpu_custom_call.1} parent=1 // loop_footer_branch
      %14 = sbr.rel target = $region3
    $region8: #{tpu_custom_call.1} parent=1 // loop_exit
      _
    %340 = vsyncpa [#allocation3], 1
    %s341 = scalar_lea.sflag [#allocation3], 1
    %342 = vsyncpa %s341, 1
    %343 = vsyncpa [#allocation6], 1
    %344 = vsyncpa [#allocation4], 1
    %s345 = scalar_lea.sflag [#allocation4], 1
    %346 = vsyncpa %s345, 1

</llo_original>
